<compile_context>
chip_gen: v7x
topology: tpu7x:2x2x1
jax: 0.10.0
libtpu: 0.0.40
codegen_flags: <defaults>
</compile_context>

<pallas_src>
import functools

import jax
import jax.numpy as jnp
from jax.experimental import pallas as pl
from jax.experimental.pallas import tpu as pltpu


# ---------------------------------------------------------------------------
# Kernel
# ---------------------------------------------------------------------------
def attention_kernel(h_ref, enc_ref, wh_ref, we_ref, b_ref, v_ref, fill_ref,
                     out_ref, *, tanh_dtype):
    """One batch tile of Bahdanau attention.

    h_ref    [Bb, Dd]   f32  decoder hidden state
    enc_ref  [Bb, S, E] f32  encoder outputs (S / E unpadded)
    wh_ref   [Dd, Dd]        hidden half of the concat Linear weight (pre-T)
    we_ref   [E,  Dd]        encoder half of the concat Linear weight (pre-T)
    b_ref    [1, Dd]    f32  Linear bias
    v_ref    [1, Dd]    f32  score vector
    fill_ref [Bb, S]    f32  0.0 => keep position, otherwise masked_fill value
    out_ref  [Bb, S]    f32  softmax attention weights
    """
    block_b, s_len, e_dim = enc_ref.shape
    d_dim = wh_ref.shape[1]
    mxu_dtype = we_ref.dtype          # bf16 for big feature dims, f32 otherwise

    # Hidden projection (+ bias folded in): S-independent, once per tile.
    hb = jnp.dot(h_ref[...].astype(mxu_dtype), wh_ref[...],
                 preferred_element_type=jnp.float32) + b_ref[...]        # [Bb, Dd]

    # Encoder projection as ONE 2-D MXU matmul over all Bb*S rows.
    # Leading-dim merge: layout-preserving when S % 8 == 0, cheap otherwise.
    enc2d = enc_ref[...].reshape(block_b * s_len, e_dim).astype(mxu_dtype)
    pe = jnp.dot(enc2d, we_ref[...],
                 preferred_element_type=jnp.float32)                     # [Bb*S, Dd]
    pe = pe.reshape(block_b, s_len, d_dim)

    # tanh on the EUP. bf16 tanh only on chips with a bf16 EUP (v6e/v7x) and
    # only when the feature dim is big enough for the EUP to be the bottleneck.
    energy = jnp.tanh((pe + hb[:, None, :]).astype(tanh_dtype)
                      ).astype(jnp.float32)                              # [Bb, S, Dd]

    # v . energy over the (small) feature axis -> [Bb, S] scores.
    scores = jnp.sum(energy * v_ref[...][None, :, :], axis=-1)

    # masked_fill(mask == 0, -1e10): fill == 0.0 means "keep".
    scores = jnp.where(fill_ref[...] == 0.0, scores, fill_ref[...])

    # Numerically-stable softmax over src_len; exact divide (scores are tiny).
    m = jnp.max(scores, axis=1, keepdims=True)
    e = jnp.exp(scores - m)
    out_ref[...] = e / jnp.sum(e, axis=1, keepdims=True)


# ---------------------------------------------------------------------------
# Tiling / VMEM heuristics
# ---------------------------------------------------------------------------
def _cdiv(a, b):
    return (a + b - 1) // b


def _round_up(x, m):
    return _cdiv(x, m) * m


def _vmem_capacity_bytes():
    try:
        return int(pltpu.get_tpu_info().vmem_capacity_bytes)
    except Exception:
        return 64 << 20    # conservative: v7x per-TensorCore VMEM is the smallest


def _has_bf16_vpu():
    """v6e / v7x have a bf16 VPU+EUP; v5e and older do not."""
    try:
        kind = jax.devices()[0].device_kind.lower()
    except Exception:
        return False
    return not any(old in kind for old in ("v2", "v3", "v4", "v5"))


def _choose_tiling(B, S, E, Dd, mxu_bytes, vmem_cap):
    """Pick (block_b, n_tiles, vmem_limit_bytes).

    The per-tile working set budgets the double-buffered f32 encoder block,
    the in-kernel cast copy AND the f32 pe/energy intermediates (the previous
    heuristic ignored the intermediates).  block_b is then chosen to minimize
    batch padding, with >= 2 tiles whenever there is enough batch for both
    v7x TensorCores to get work.
    """
    budget = vmem_cap // 4
    per_row = (2 * S * E * 4              # f32 enc block, double-buffered
               + S * E * mxu_bytes        # in-kernel cast copy for the MXU
               + 3 * S * Dd * 4           # pe, pre-activation, energy (f32)
               + 2 * S * 4 + 64)          # out block (x2) + slack
    fixed = 2 * (Dd * Dd + E * Dd) * mxu_bytes + 4 * Dd * 4 + (256 << 10)
    bb_max = max(8, ((budget - fixed) // max(per_row, 1)) // 8 * 8)
    bb_max = min(bb_max, 1024)

    if B <= 8:
        block_b, n_tiles = 8, 1
    else:
        n_tiles = max(2, _cdiv(B, bb_max))           # keep both v7x TCs busy
        block_b = min(bb_max, _round_up(_cdiv(B, n_tiles), 8))
        n_tiles = _cdiv(B, block_b)
        if n_tiles % 2 == 1 and n_tiles > 1:         # prefer even tile counts,
            alt_bb = _round_up(_cdiv(B, n_tiles + 1), 8)   # but never pay more
            if alt_bb * (n_tiles + 1) <= block_b * n_tiles:  # batch padding for it
                block_b = alt_bb
                n_tiles = _cdiv(B, block_b)

    working_set = fixed + block_b * per_row
    vmem_limit = int(min(vmem_cap * 3 // 4, max(32 << 20, 2 * working_set)))
    return block_b, n_tiles, vmem_limit


# ---------------------------------------------------------------------------
# Parameter prep (one-time, hoisted out of the forward)
# ---------------------------------------------------------------------------
def prepare_params(attn_weight, attn_bias, v, dec_hidden_dim):
    """Split + transpose the torch concat-Linear weight.  MXU operands go to
    bf16 only when the feature dims are large enough for the MXU to matter;
    for small dims (< 128) everything stays f32 (accuracy is then free)."""
    Dd = dec_hidden_dim
    E = attn_weight.shape[1] - Dd
    mxu_dtype = jnp.bfloat16 if max(E, Dd) >= 128 else jnp.float32
    wh = jnp.asarray(attn_weight[:, :Dd].T, dtype=mxu_dtype)   # [Dd, Dd]
    we = jnp.asarray(attn_weight[:, Dd:].T, dtype=mxu_dtype)   # [E,  Dd]
    b2 = jnp.asarray(attn_bias, dtype=jnp.float32).reshape(1, Dd)
    v2 = jnp.asarray(v, dtype=jnp.float32).reshape(1, Dd)
    return wh, we, b2, v2


# ---------------------------------------------------------------------------
# Forward
# ---------------------------------------------------------------------------
def attention_forward(hidden, encoder_outputs, params, mask=None):
    """hidden [B, Dd] f32, encoder_outputs [B, S, E] f32, mask [B, S]
    (0 == masked).  Returns softmax attention weights [B, S] (f32)."""
    wh, we, b2, v2 = params
    B, S, E = encoder_outputs.shape
    Dd = hidden.shape[1]

    vmem_cap = _vmem_capacity_bytes()
    block_b, n_tiles, vmem_limit = _choose_tiling(
        B, S, E, Dd, jnp.dtype(we.dtype).itemsize, vmem_cap)
    B_pad = block_b * n_tiles

    # Encoder outputs stay 3-D, un-cast and S/E-unpadded: the kernel reads them
    # straight from HBM.  Only the (small) batch-tile remainder is zero-padded.
    enc = encoder_outputs.astype(jnp.float32)
    if B_pad > B:
        enc = jnp.pad(enc, ((0, B_pad - B), (0, 0), (0, 0)))

    h_p = jnp.pad(hidden.astype(jnp.float32), ((0, B_pad - B), (0, 0)))

    # fill == 0.0 -> keep; otherwise the masked_fill value (-1e10, as in torch).
    if mask is None:
        fill = jnp.zeros((B, S), dtype=jnp.float32)
    else:
        fill = jnp.where(mask != 0, 0.0, -1e10).astype(jnp.float32)
    fill_p = jnp.pad(fill, ((0, B_pad - B), (0, 0)))   # padded batch rows: keep

    tanh_dtype = (jnp.bfloat16
                  if (we.dtype == jnp.bfloat16 and _has_bf16_vpu())
                  else jnp.float32)
    kernel = functools.partial(attention_kernel, tanh_dtype=tanh_dtype)

    out = pl.pallas_call(
        kernel,
        out_shape=jax.ShapeDtypeStruct((B_pad, S), jnp.float32),
        grid=(n_tiles,),
        in_specs=[
            pl.BlockSpec((block_b, Dd),    lambda i: (i, 0)),     # hidden
            pl.BlockSpec((block_b, S, E),  lambda i: (i, 0, 0)),  # encoder outputs
            pl.BlockSpec((Dd, Dd),         lambda i: (0, 0)),     # Wh (resident)
            pl.BlockSpec((E, Dd),          lambda i: (0, 0)),     # We (resident)
            pl.BlockSpec((1, Dd),          lambda i: (0, 0)),     # bias
            pl.BlockSpec((1, Dd),          lambda i: (0, 0)),     # v
            pl.BlockSpec((block_b, S),     lambda i: (i, 0)),     # fill / mask
        ],
        out_specs=pl.BlockSpec((block_b, S), lambda i: (i, 0)),
        compiler_params=pltpu.CompilerParams(
            dimension_semantics=("parallel",),
            vmem_limit_bytes=vmem_limit),
    )(h_p, enc, wh, we, b2, v2, fill_p)

    return out[:B] if B_pad > B else out


# ---------------------------------------------------------------------------
# Pure-JAX reference (matches the PyTorch forward exactly)
# ---------------------------------------------------------------------------
def attention_reference(hidden, encoder_outputs, attn_weight, attn_bias, v,
                        mask=None):
    B, S, E = encoder_outputs.shape
    h_rep = jnp.repeat(hidden[:, None, :], S, axis=1)
    cat = jnp.concatenate([h_rep, encoder_outputs], axis=2)
    energy = jnp.tanh(cat @ attn_weight.T + attn_bias)
    attention = jnp.einsum("d,bsd->bs", v, energy)
    if mask is not None:
        attention = jnp.where(mask == 0, -1e10, attention)
    return jax.nn.softmax(attention, axis=1)


if __name__ == "__main__":
    enc_hidden_dim = 32
    dec_hidden_dim = 32
    B, S = 2, 8

    key = jax.random.PRNGKey(0)
    k1, k2, k3, k4, k5 = jax.random.split(key, 5)

    # Deterministic "module parameters" (shapes from Attention.__init__).
    attn_weight = jax.random.uniform(
        k1, (dec_hidden_dim, enc_hidden_dim + dec_hidden_dim),
        minval=-0.1, maxval=0.1, dtype=jnp.float32)
    attn_bias = jax.random.uniform(
        k2, (dec_hidden_dim,), minval=-0.1, maxval=0.1, dtype=jnp.float32)
    v_param = jax.random.uniform(k3, (dec_hidden_dim,), dtype=jnp.float32)

    # Inputs.
    hidden = jax.random.normal(k4, (B, dec_hidden_dim), dtype=jnp.float32)
    encoder_outputs = jax.random.normal(k5, (B, S, enc_hidden_dim),
                                        dtype=jnp.float32)
    # Simple mask: last two source positions of batch 1 are padding.
    mask = jnp.ones((B, S), dtype=jnp.int32).at[1, -2:].set(0)

    params = prepare_params(attn_weight, attn_bias, v_param, dec_hidden_dim)

    out = attention_forward(hidden, encoder_outputs, params, mask)
    out = jax.block_until_ready(out)

    ref = attention_reference(hidden, encoder_outputs, attn_weight, attn_bias,
                              v_param, mask)
    assert out.shape == (B, S)
    assert jnp.allclose(out, ref, atol=2e-2, rtol=2e-2)
    assert jnp.allclose(jnp.sum(out, axis=1), 1.0, atol=1e-3)

    print("KERNEL_OK")
</pallas_src>

<mosaic_0001>
module attributes {stable_mosaic.version = 11 : i64} {
  func.func @attention_kernel(%arg0: i32, %arg1: memref<8x32xf32, #tpu.memory_space<vmem>>, %arg2: memref<8x8x32xf32, #tpu.memory_space<vmem>>, %arg3: memref<32x32xf32, #tpu.memory_space<vmem>>, %arg4: memref<32x32xf32, #tpu.memory_space<vmem>>, %arg5: memref<1x32xf32, #tpu.memory_space<vmem>>, %arg6: memref<1x32xf32, #tpu.memory_space<vmem>>, %arg7: memref<8x8xf32, #tpu.memory_space<vmem>>, %arg8: memref<8x8xf32, #tpu.memory_space<vmem>>) attributes {dimension_semantics = [#tpu.dimension_semantics<parallel>], iteration_bounds = array<i64: 1>, scalar_prefetch = 0 : i64, scratch_operands = 0 : i64, tpu.core_type = #tpu.core_type<tc>, window_params = [{transform_indices = @transform_0, window_bounds = array<i64: 8, 32>}, {transform_indices = @transform_1, window_bounds = array<i64: 8, 8, 32>}, {pipeline_mode = #tpu.pipeline_mode<synchronous>, transform_indices = @transform_2, window_bounds = array<i64: 32, 32>}, {pipeline_mode = #tpu.pipeline_mode<synchronous>, transform_indices = @transform_3, window_bounds = array<i64: 32, 32>}, {pipeline_mode = #tpu.pipeline_mode<synchronous>, transform_indices = @transform_4, window_bounds = array<i64: 1, 32>}, {pipeline_mode = #tpu.pipeline_mode<synchronous>, transform_indices = @transform_5, window_bounds = array<i64: 1, 32>}, {transform_indices = @transform_6, window_bounds = array<i64: 8, 8>}, {transform_indices = @transform_7, window_bounds = array<i64: 8, 8>}]} {
    %c0 = arith.constant 0 : index
    %c0_0 = arith.constant 0 : index
    %0 = vector.load %arg1[%c0, %c0_0] : memref<8x32xf32, #tpu.memory_space<vmem>>, vector<8x32xf32>
    %c0_1 = arith.constant 0 : index
    %c0_2 = arith.constant 0 : index
    %1 = vector.load %arg3[%c0_1, %c0_2] : memref<32x32xf32, #tpu.memory_space<vmem>>, vector<32x32xf32>
    %cst = arith.constant dense<0.000000e+00> : vector<8x32xf32>
    %2 = tpu.matmul %0, %1, %cst {dimension_numbers = #tpu.dot_dimension_numbers<[1], [0], [0], [1], [0, 0, 1, 1], [], []>} : vector<8x32xf32>, vector<32x32xf32>, vector<8x32xf32> -> vector<8x32xf32>
    %c0_3 = arith.constant 0 : index
    %c0_4 = arith.constant 0 : index
    %3 = vector.load %arg5[%c0_3, %c0_4] : memref<1x32xf32, #tpu.memory_space<vmem>>, vector<1x32xf32>
    %4 = vector.broadcast %3 : vector<1x32xf32> to vector<8x32xf32>
    %5 = arith.addf %2, %4 : vector<8x32xf32>
    %c0_5 = arith.constant 0 : index
    %c0_6 = arith.constant 0 : index
    %c0_7 = arith.constant 0 : index
    %6 = vector.load %arg2[%c0_5, %c0_6, %c0_7] : memref<8x8x32xf32, #tpu.memory_space<vmem>>, vector<8x8x32xf32>
    %7 = vector.shape_cast %6 : vector<8x8x32xf32> to vector<64x32xf32>
    %c0_8 = arith.constant 0 : index
    %c0_9 = arith.constant 0 : index
    %8 = vector.load %arg4[%c0_8, %c0_9] : memref<32x32xf32, #tpu.memory_space<vmem>>, vector<32x32xf32>
    %cst_10 = arith.constant dense<0.000000e+00> : vector<64x32xf32>
    %9 = tpu.matmul %7, %8, %cst_10 {dimension_numbers = #tpu.dot_dimension_numbers<[1], [0], [0], [1], [0, 0, 1, 1], [], []>} : vector<64x32xf32>, vector<32x32xf32>, vector<64x32xf32> -> vector<64x32xf32>
    %10 = vector.shape_cast %9 : vector<64x32xf32> to vector<8x8x32xf32>
    %11 = vector.shape_cast %5 : vector<8x32xf32> to vector<8x1x32xf32>
    %12 = vector.broadcast %11 : vector<8x1x32xf32> to vector<8x8x32xf32>
    %13 = arith.addf %10, %12 : vector<8x8x32xf32>
    %14 = math.tanh %13 : vector<8x8x32xf32>
    %c0_11 = arith.constant 0 : index
    %c0_12 = arith.constant 0 : index
    %15 = vector.load %arg6[%c0_11, %c0_12] : memref<1x32xf32, #tpu.memory_space<vmem>>, vector<1x32xf32>
    %16 = vector.shape_cast %15 : vector<1x32xf32> to vector<1x1x32xf32>
    %17 = vector.broadcast %16 : vector<1x1x32xf32> to vector<8x8x32xf32>
    %18 = arith.mulf %14, %17 : vector<8x8x32xf32>
    %cst_13 = arith.constant dense<0.000000e+00> : vector<8x8xf32>
    %19 = vector.multi_reduction <add>, %18, %cst_13 [2] : vector<8x8x32xf32> to vector<8x8xf32>
    %c0_14 = arith.constant 0 : index
    %c0_15 = arith.constant 0 : index
    %20 = vector.load %arg7[%c0_14, %c0_15] : memref<8x8xf32, #tpu.memory_space<vmem>>, vector<8x8xf32>
    %cst_16 = arith.constant 0.000000e+00 : f32
    %21 = vector.broadcast %cst_16 : f32 to vector<8x8xf32>
    %22 = arith.cmpf oeq, %20, %21 : vector<8x8xf32>
    %c0_17 = arith.constant 0 : index
    %c0_18 = arith.constant 0 : index
    %23 = vector.load %arg7[%c0_17, %c0_18] : memref<8x8xf32, #tpu.memory_space<vmem>>, vector<8x8xf32>
    %24 = arith.select %22, %19, %23 : vector<8x8xi1>, vector<8x8xf32>
    %cst_19 = arith.constant dense<0xFF800000> : vector<8xf32>
    %25 = vector.multi_reduction <maximumf>, %24, %cst_19 [1] : vector<8x8xf32> to vector<8xf32>
    %26 = vector.shape_cast %25 : vector<8xf32> to vector<8x1xf32>
    %27 = vector.broadcast %26 : vector<8x1xf32> to vector<8x8xf32>
    %28 = arith.subf %24, %27 : vector<8x8xf32>
    %29 = math.exp %28 : vector<8x8xf32>
    %cst_20 = arith.constant dense<0.000000e+00> : vector<8xf32>
    %30 = vector.multi_reduction <add>, %29, %cst_20 [1] : vector<8x8xf32> to vector<8xf32>
    %31 = vector.shape_cast %30 : vector<8xf32> to vector<8x1xf32>
    %32 = vector.broadcast %31 : vector<8x1xf32> to vector<8x8xf32>
    %33 = arith.divf %29, %32 : vector<8x8xf32>
    %c0_21 = arith.constant 0 : index
    %c0_22 = arith.constant 0 : index
    %34 = vector.load %arg8[%c0_21, %c0_22] : memref<8x8xf32, #tpu.memory_space<vmem>>, vector<8x8xf32>
    tpu.vector_store %arg8[%c0_21, %c0_22], %33 {strides = array<i32>} : memref<8x8xf32, #tpu.memory_space<vmem>>, vector<8x8xf32>,
    return
  }
  func.func @transform_0(%arg0: i32) -> (i32, i32) {
    %c0_i32 = arith.constant 0 : i32
    %c0_i32_0 = arith.constant 0 : i32
    return %arg0, %c0_i32 : i32, i32
  }
  func.func @transform_1(%arg0: i32) -> (i32, i32, i32) {
    %c0_i32 = arith.constant 0 : i32
    %c0_i32_0 = arith.constant 0 : i32
    %c0_i32_1 = arith.constant 0 : i32
    return %arg0, %c0_i32, %c0_i32_0 : i32, i32, i32
  }
  func.func @transform_2(%arg0: i32) -> (i32, i32) {
    %c0_i32 = arith.constant 0 : i32
    %c0_i32_0 = arith.constant 0 : i32
    %c0_i32_1 = arith.constant 0 : i32
    return %c0_i32, %c0_i32_0 : i32, i32
  }
  func.func @transform_3(%arg0: i32) -> (i32, i32) {
    %c0_i32 = arith.constant 0 : i32
    %c0_i32_0 = arith.constant 0 : i32
    %c0_i32_1 = arith.constant 0 : i32
    return %c0_i32, %c0_i32_0 : i32, i32
  }
  func.func @transform_4(%arg0: i32) -> (i32, i32) {
    %c0_i32 = arith.constant 0 : i32
    %c0_i32_0 = arith.constant 0 : i32
    %c0_i32_1 = arith.constant 0 : i32
    return %c0_i32, %c0_i32_0 : i32, i32
  }
  func.func @transform_5(%arg0: i32) -> (i32, i32) {
    %c0_i32 = arith.constant 0 : i32
    %c0_i32_0 = arith.constant 0 : i32
    %c0_i32_1 = arith.constant 0 : i32
    return %c0_i32, %c0_i32_0 : i32, i32
  }
  func.func @transform_6(%arg0: i32) -> (i32, i32) {
    %c0_i32 = arith.constant 0 : i32
    %c0_i32_0 = arith.constant 0 : i32
    return %arg0, %c0_i32 : i32, i32
  }
  func.func @transform_7(%arg0: i32) -> (i32, i32) {
    %c0_i32 = arith.constant 0 : i32
    %c0_i32_0 = arith.constant 0 : i32
    return %arg0, %c0_i32 : i32, i32
  }
}

</mosaic_0001>

<llo_original>
// kernel: tpu_custom_call.1
$region0: #{tpu_custom_call.1}
  #allocation0 [shape = 'u32[]', space=smem, size = 0x4, offset = 0x4, fixed_abs, tag = 'smem constant byte address 0x4 - core index']
  #allocation1 [shape = 'u32[144,128]{1,0:T(1,128)}', space=vmem, size = 0x12000, scoped, tag = 'internal scratch']
  %s0 = inlined_call_operand.hbm [shape: f32[8,32], index: 0, kind: input, shape index: {}]
  %s1 = inlined_call_operand.hbm [shape: f32[8,8,32], index: 1, kind: input, shape index: {}]
  %s2 = inlined_call_operand.hbm [shape: f32[32,32], index: 2, kind: input, shape index: {}]
  %s3 = inlined_call_operand.hbm [shape: f32[32,32], index: 3, kind: input, shape index: {}]
  %s4 = inlined_call_operand.vmem [shape: f32[1,32], index: 4, kind: input, shape index: {}]
  %s5 = inlined_call_operand.vmem [shape: f32[1,32], index: 5, kind: input, shape index: {}]
  %s6 = inlined_call_operand.vmem [shape: f32[8,8], index: 6, kind: input, shape index: {}]
  %s7 = inlined_call_operand.hbm [shape: f32[8,8], index: 7, kind: output, shape index: {}]
  %s8 = sld [smem:[#allocation0]]
  $region54: #{tpu_custom_call.1} parent=0
    _
  %s10 = ssub.s32 1, %s8
  %s11 = scalar_select 0, %s10, %s8
  $region1: #{tpu_custom_call.1} parent=0
    #allocation2 [shape = 'u8[4096]{0}', space=vmem, size = 0x1000, scoped, tag = 'input window, operand 0, single buffered']
    #allocation3 [shape = 's32[1]{0}', space=sflag, size = 0x4, scoped, tag = 'scoped memory for tpu_custom_call.1']
    #allocation4 [shape = 's32[1]{0}', space=sflag, size = 0x4, scoped, tag = 'scoped memory for tpu_custom_call.1']
    #allocation5 [shape = 'u8[32768]{0}', space=vmem, size = 0x8000, scoped, tag = 'input window, operand 1, single buffered']
    #allocation6 [shape = 's32[1]{0}', space=sflag, size = 0x4, scoped, tag = 'scoped memory for tpu_custom_call.1']
    #allocation7 [shape = 'u8[16384]{0}', space=vmem, size = 0x4000, scoped, tag = 'input window, operand 2, single buffered']
    #allocation8 [shape = 'u8[16384]{0}', space=vmem, size = 0x4000, scoped, tag = 'input window, operand 3, single buffered']
    #allocation9 [shape = 's32[1]{0}', space=sflag, size = 0x4, scoped, tag = 'scoped memory for tpu_custom_call.1']
    #allocation10 [shape = 'u8[4096]{0}', space=vmem, size = 0x1000, scoped, tag = 'output window, operand 0, single buffered']
    %12 = vsyncpa [#allocation3], 0
    %13 = vsyncpa [#allocation6], 0
    %14 = vsyncpa [#allocation9], 0
    %15 = vsyncpa [#allocation4], 0
    // Predicated region
    $region2: #{tpu_custom_call.1} parent=1 // pred_check
      _
    $region3: #{tpu_custom_call.1} parent=1 // pred_check_branch
      %17 = sbr.rel (0) target = $region5
    $region4: #{tpu_custom_call.1} parent=1 // pred_region
      %s19 = ssub.s32 128, 128
      %20 = vsyncadd [#allocation3], %s19
      %s22 = sshll.u32 [#allocation2], 4
      %s23 = int_to_ptr.vmem [resolvable:$true] %s22
      %25 = dma.hbm_to_vmem [thread:$0]  %s0, 128, %s23, [#allocation3]
    $region5: #{tpu_custom_call.1} parent=1 // pred_fallthru
      _
    // Predicated region
    $region6: #{tpu_custom_call.1} parent=1 // pred_check
      _
    $region7: #{tpu_custom_call.1} parent=1 // pred_check_branch
      %27 = sbr.rel (0) target = $region9
    $region8: #{tpu_custom_call.1} parent=1 // pred_region
      %s29 = ssub.s32 1024, 1024
      %30 = vsyncadd [#allocation6], %s29
      %s31 = sshll.u32 [#allocation5], 4
      %s32 = int_to_ptr.vmem [resolvable:$true] %s31
      %37 = dma.hbm_to_vmem [thread:$0]  %s1, 1024, %s32, [#allocation6], 128, 128, 8
    $region9: #{tpu_custom_call.1} parent=1 // pred_fallthru
      _
    // Predicated region
    $region10: #{tpu_custom_call.1} parent=1 // pred_check
      _
    $region11: #{tpu_custom_call.1} parent=1 // pred_check_branch
      %39 = sbr.rel (0) target = $region13
    $region12: #{tpu_custom_call.1} parent=1 // pred_region
      %s41 = ssub.s32 512, 512
      %42 = vsyncadd [#allocation6], %s41
      %s43 = sshll.u32 [#allocation7], 4
      %s44 = int_to_ptr.vmem [resolvable:$true] %s43
      %49 = dma.hbm_to_vmem [thread:$0]  %s2, 512, %s44, [#allocation6], 128, 128, 8
    $region13: #{tpu_custom_call.1} parent=1 // pred_fallthru
      _
    // Predicated region
    $region14: #{tpu_custom_call.1} parent=1 // pred_check
      _
    $region15: #{tpu_custom_call.1} parent=1 // pred_check_branch
      %51 = sbr.rel (0) target = $region17
    $region16: #{tpu_custom_call.1} parent=1 // pred_region
      %s53 = ssub.s32 512, 512
      %54 = vsyncadd [#allocation9], %s53
      %s55 = sshll.u32 [#allocation8], 4
      %s56 = int_to_ptr.vmem [resolvable:$true] %s55
      %61 = dma.hbm_to_vmem [thread:$0]  %s3, 512, %s56, [#allocation9], 128, 128, 8
    $region17: #{tpu_custom_call.1} parent=1 // pred_fallthru
      _
    // Predicated region
    $region18: #{tpu_custom_call.1} parent=1 // pred_check
      _
    $region19: #{tpu_custom_call.1} parent=1 // pred_check_branch
      %63 = sbr.rel (0) target = $region21
    $region20: #{tpu_custom_call.1} parent=1 // pred_region
      _
    $region21: #{tpu_custom_call.1} parent=1 // pred_fallthru
      _
    // Predicated region
    $region22: #{tpu_custom_call.1} parent=1 // pred_check
      _
    $region23: #{tpu_custom_call.1} parent=1 // pred_check_branch
      %65 = sbr.rel (0) target = $region25
    $region24: #{tpu_custom_call.1} parent=1 // pred_region
      _
    $region25: #{tpu_custom_call.1} parent=1 // pred_fallthru
      _
    // Predicated region
    $region26: #{tpu_custom_call.1} parent=1 // pred_check
      _
    $region27: #{tpu_custom_call.1} parent=1 // pred_check_branch
      %67 = sbr.rel (0) target = $region29
    $region28: #{tpu_custom_call.1} parent=1 // pred_region
      _
    $region29: #{tpu_custom_call.1} parent=1 // pred_fallthru
      _
    // Predicated region
    $region30: #{tpu_custom_call.1} parent=1 // pred_check
      _
    $region31: #{tpu_custom_call.1} parent=1 // pred_check_branch
      %69 = sbr.rel (0) target = $region33
    $region32: #{tpu_custom_call.1} parent=1 // pred_region
      %70 = dma.done [#allocation3], 128
    $region33: #{tpu_custom_call.1} parent=1 // pred_fallthru
      _
    // Predicated region
    $region34: #{tpu_custom_call.1} parent=1 // pred_check
      _
    $region35: #{tpu_custom_call.1} parent=1 // pred_check_branch
      %72 = sbr.rel (0) target = $region37
    $region36: #{tpu_custom_call.1} parent=1 // pred_region
      %73 = dma.done [#allocation6], 1024
    $region37: #{tpu_custom_call.1} parent=1 // pred_fallthru
      _
    // Predicated region
    $region38: #{tpu_custom_call.1} parent=1 // pred_check
      _
    $region39: #{tpu_custom_call.1} parent=1 // pred_check_branch
      %75 = sbr.rel (0) target = $region41
    $region40: #{tpu_custom_call.1} parent=1 // pred_region
      %76 = dma.done [#allocation6], 512
    $region41: #{tpu_custom_call.1} parent=1 // pred_fallthru
      _
    // Predicated region
    $region42: #{tpu_custom_call.1} parent=1 // pred_check
      _
    $region43: #{tpu_custom_call.1} parent=1 // pred_check_branch
      %78 = sbr.rel (0) target = $region45
    $region44: #{tpu_custom_call.1} parent=1 // pred_region
      %79 = dma.done [#allocation9], 512
    $region45: #{tpu_custom_call.1} parent=1 // pred_fallthru
      _
    %v80 = vld [vmem:[#allocation2] sm:$0xff]
    %v81 = vld [vmem:[#allocation7] sm:$0xff]
    %v82 = vld [vmem:[#allocation7 + $0x8] sm:$0xff]
    %v83 = vld [vmem:[#allocation7 + $0x10] sm:$0xff]
    %v84 = vld [vmem:[#allocation7 + $0x18] sm:$0xff]
    %v85 = vld [vmem:[%s4] sm:$0x1]
    %v87 = vlaneseq
    %v88 = vshrl.u32 %v87, 7
    %v89 = vsub.s32 0, %v88
    %v90 = vrot.slane %v85, %v89
    %vm92 = vcmask 261120
    %v94 = vsel %vm92, %v80, 0
    %96 = vmatprep.subr.mxu0 0.0
    %97 = vmatpush1.msra.mxu0 %v81
    %98 = vmatprep.subr.mxu0 0.0
    %99 = vmatpush1.msra.mxu0 %v82
    %100 = vmatprep.subr.mxu0 0.0
    %101 = vmatpush1.msra.mxu0 %v83
    %102 = vmatprep.subr.mxu0 0.0
    %103 = vmatpush1.msra.mxu0 %v84
    %104 = vmatprep.subr.mxu0 0.0
    %105 = vmatpush1.msra.mxu0 0.0
    %106 = vmatprep.subr.mxu0 0.0
    %107 = vmatpush1.msra.mxu0 0.0
    %108 = vmatprep.subr.mxu0 0.0
    %109 = vmatpush1.msra.mxu0 0.0
    %110 = vmatprep.subr.mxu0 0.0
    %111 = vmatpush1.msra.mxu0 0.0
    %112 = vmatprep.subr.mxu0 0.0
    %113 = vmatpush1.msra.mxu0 0.0
    %114 = vmatprep.subr.mxu0 0.0
    %115 = vmatpush1.msra.mxu0 0.0
    %116 = vmatprep.subr.mxu0 0.0
    %117 = vmatpush1.msra.mxu0 0.0
    %118 = vmatprep.subr.mxu0 0.0
    %119 = vmatpush1.msra.mxu0 0.0
    %120 = vmatprep.subr.mxu0 0.0
    %121 = vmatpush1.msra.mxu0 0.0
    %122 = vmatprep.subr.mxu0 0.0
    %123 = vmatpush1.msra.mxu0 0.0
    %124 = vmatprep.subr.mxu0 0.0
    %125 = vmatpush1.msra.mxu0 0.0
    %126 = vmatprep.subr.mxu0 0.0
    %127 = vmatpush1.msra.mxu0 0.0
    %128 = vmatprep.subr.mxu0 0.0
    %129 = vmatpush1.msra.mxu0 0.0
    %130 = vmatprep.subr.mxu0 0.0
    %131 = vmatpush1.msra.mxu0 0.0
    %132 = vmatprep.subr.mxu0 0.0
    %133 = vmatpush1.msra.mxu0 0.0
    %134 = vmatprep.subr.mxu0 0.0
    %135 = vmatpush1.msra.mxu0 0.0
    %136 = vmatprep.subr.mxu0 0.0
    %137 = vmatpush1.msra.mxu0 0.0
    %138 = vmatprep.subr.mxu0 0.0
    %139 = vmatpush1.msra.mxu0 0.0
    %140 = vmatprep.subr.mxu0 0.0
    %141 = vmatpush1.msra.mxu0 0.0
    %142 = vmatprep.subr.mxu0 0.0
    %143 = vmatpush1.msra.mxu0 0.0
    %144 = vmatprep.subr.mxu0 0.0
    %145 = vmatpush1.msra.mxu0 0.0
    %146 = vmatprep.subr.mxu0 0.0
    %147 = vmatpush1.msra.mxu0 0.0
    %148 = vmatprep.subr.mxu0 0.0
    %149 = vmatpush1.msra.mxu0 0.0
    %150 = vmatprep.subr.mxu0 0.0
    %151 = vmatpush1.msra.mxu0 0.0
    %152 = vmatprep.subr.mxu0 0.0
    %153 = vmatpush1.msra.mxu0 0.0
    %154 = vmatprep.subr.mxu0 0.0
    %155 = vmatpush1.msra.mxu0 0.0
    %156 = vmatprep.subr.mxu0 0.0
    %157 = vmatpush1.msra.mxu0 0.0
    %158 = vmatprep.subr.mxu0 0.0
    %159 = vmatpush1.msra.mxu0 0.0
    %160 = vmatprep.mubr.f32.mxu0 0.0
    %161 = vmatmul.mubr.f32.gmra.mrb[0].mxu0 %v94
    %v162 = vpop.f32.mrb[0].mxu0
    %v163 = vadd.f32 %v90, %v162
    %v164 = vpop.f32.mrb[0].mxu0
    %165 = vdwg.mxu0
    %v166 = vld [vmem:[#allocation5] sm:$0xff]
    %v167 = vld [vmem:[#allocation5 + $0x8] sm:$0xff]
    %v168 = vld [vmem:[#allocation5 + $0x10] sm:$0xff]
    %v169 = vld [vmem:[#allocation5 + $0x18] sm:$0xff]
    %v170 = vld [vmem:[#allocation5 + $0x20] sm:$0xff]
    %v171 = vld [vmem:[#allocation5 + $0x28] sm:$0xff]
    %v172 = vld [vmem:[#allocation5 + $0x30] sm:$0xff]
    %v173 = vld [vmem:[#allocation5 + $0x38] sm:$0xff]
    %v174 = vld [vmem:[#allocation8] sm:$0xff]
    %v175 = vld [vmem:[#allocation8 + $0x8] sm:$0xff]
    %v176 = vld [vmem:[#allocation8 + $0x10] sm:$0xff]
    %v177 = vld [vmem:[#allocation8 + $0x18] sm:$0xff]
    %v179 = vsel %vm92, %v166, 0
    %v182 = vsel %vm92, %v167, 0
    %v185 = vsel %vm92, %v168, 0
    %v188 = vsel %vm92, %v169, 0
    %v191 = vsel %vm92, %v170, 0
    %v194 = vsel %vm92, %v171, 0
    %v197 = vsel %vm92, %v172, 0
    %v200 = vsel %vm92, %v173, 0
    %202 = vmatprep.subr.mxu0 0.0
    %203 = vmatpush1.msra.mxu0 %v174
    %204 = vmatprep.subr.mxu0 0.0
    %205 = vmatpush1.msra.mxu0 %v175
    %206 = vmatprep.subr.mxu0 0.0
    %207 = vmatpush1.msra.mxu0 %v176
    %208 = vmatprep.subr.mxu0 0.0
    %209 = vmatpush1.msra.mxu0 %v177
    %210 = vmatprep.subr.mxu0 0.0
    %211 = vmatpush1.msra.mxu0 0.0
    %212 = vmatprep.subr.mxu0 0.0
    %213 = vmatpush1.msra.mxu0 0.0
    %214 = vmatprep.subr.mxu0 0.0
    %215 = vmatpush1.msra.mxu0 0.0
    %216 = vmatprep.subr.mxu0 0.0
    %217 = vmatpush1.msra.mxu0 0.0
    %218 = vmatprep.subr.mxu0 0.0
    %219 = vmatpush1.msra.mxu0 0.0
    %220 = vmatprep.subr.mxu0 0.0
    %221 = vmatpush1.msra.mxu0 0.0
    %222 = vmatprep.subr.mxu0 0.0
    %223 = vmatpush1.msra.mxu0 0.0
    %224 = vmatprep.subr.mxu0 0.0
    %225 = vmatpush1.msra.mxu0 0.0
    %226 = vmatprep.subr.mxu0 0.0
    %227 = vmatpush1.msra.mxu0 0.0
    %228 = vmatprep.subr.mxu0 0.0
    %229 = vmatpush1.msra.mxu0 0.0
    %230 = vmatprep.subr.mxu0 0.0
    %231 = vmatpush1.msra.mxu0 0.0
    %232 = vmatprep.subr.mxu0 0.0
    %233 = vmatpush1.msra.mxu0 0.0
    %234 = vmatprep.subr.mxu0 0.0
    %235 = vmatpush1.msra.mxu0 0.0
    %236 = vmatprep.subr.mxu0 0.0
    %237 = vmatpush1.msra.mxu0 0.0
    %238 = vmatprep.subr.mxu0 0.0
    %239 = vmatpush1.msra.mxu0 0.0
    %240 = vmatprep.subr.mxu0 0.0
    %241 = vmatpush1.msra.mxu0 0.0
    %242 = vmatprep.subr.mxu0 0.0
    %243 = vmatpush1.msra.mxu0 0.0
    %244 = vmatprep.subr.mxu0 0.0
    %245 = vmatpush1.msra.mxu0 0.0
    %246 = vmatprep.subr.mxu0 0.0
    %247 = vmatpush1.msra.mxu0 0.0
    %248 = vmatprep.subr.mxu0 0.0
    %249 = vmatpush1.msra.mxu0 0.0
    %250 = vmatprep.subr.mxu0 0.0
    %251 = vmatpush1.msra.mxu0 0.0
    %252 = vmatprep.subr.mxu0 0.0
    %253 = vmatpush1.msra.mxu0 0.0
    %254 = vmatprep.subr.mxu0 0.0
    %255 = vmatpush1.msra.mxu0 0.0
    %256 = vmatprep.subr.mxu0 0.0
    %257 = vmatpush1.msra.mxu0 0.0
    %258 = vmatprep.subr.mxu0 0.0
    %259 = vmatpush1.msra.mxu0 0.0
    %260 = vmatprep.subr.mxu0 0.0
    %261 = vmatpush1.msra.mxu0 0.0
    %262 = vmatprep.subr.mxu0 0.0
    %263 = vmatpush1.msra.mxu0 0.0
    %264 = vmatprep.subr.mxu0 0.0
    %265 = vmatpush1.msra.mxu0 0.0
    %266 = vmatprep.mubr.f32.mxu0 0.0
    %267 = vmatmul.mubr.f32.gmra.mrb[0].mxu0 %v179
    %v268 = vpop.f32.mrb[0].mxu0
    %v269 = vadd.f32 0.0, %v268
    %v270 = vpop.f32.mrb[0].mxu0
    %271 = vmatprep.mubr.f32.mxu0 0.0
    %272 = vmatmul.mubr.f32.gmra.mrb[0].mxu0 %v182
    %v273 = vpop.f32.mrb[0].mxu0
    %v274 = vadd.f32 0.0, %v273
    %v275 = vpop.f32.mrb[0].mxu0
    %276 = vmatprep.mubr.f32.mxu0 0.0
    %277 = vmatmul.mubr.f32.gmra.mrb[0].mxu0 %v185
    %v278 = vpop.f32.mrb[0].mxu0
    %v279 = vadd.f32 0.0, %v278
    %v280 = vpop.f32.mrb[0].mxu0
    %281 = vmatprep.mubr.f32.mxu0 0.0
    %282 = vmatmul.mubr.f32.gmra.mrb[0].mxu0 %v188
    %v283 = vpop.f32.mrb[0].mxu0
    %v284 = vadd.f32 0.0, %v283
    %v285 = vpop.f32.mrb[0].mxu0
    %286 = vmatprep.mubr.f32.mxu0 0.0
    %287 = vmatmul.mubr.f32.gmra.mrb[0].mxu0 %v191
    %v288 = vpop.f32.mrb[0].mxu0
    %v289 = vadd.f32 0.0, %v288
    %v290 = vpop.f32.mrb[0].mxu0
    %291 = vmatprep.mubr.f32.mxu0 0.0
    %292 = vmatmul.mubr.f32.gmra.mrb[0].mxu0 %v194
    %v293 = vpop.f32.mrb[0].mxu0
    %v294 = vadd.f32 0.0, %v293
    %v295 = vpop.f32.mrb[0].mxu0
    %296 = vmatprep.mubr.f32.mxu0 0.0
    %297 = vmatmul.mubr.f32.gmra.mrb[0].mxu0 %v197
    %v298 = vpop.f32.mrb[0].mxu0
    %v299 = vadd.f32 0.0, %v298
    %v300 = vpop.f32.mrb[0].mxu0
    %301 = vmatprep.mubr.f32.mxu0 0.0
    %302 = vmatmul.mubr.f32.gmra.mrb[0].mxu0 %v200
    %v303 = vpop.f32.mrb[0].mxu0
    %v304 = vadd.f32 0.0, %v303
    %v305 = vpop.f32.mrb[0].mxu0
    %306 = vdwg.mxu0
    %v308 = vcombine.high %v163, %v163
    %v310 = vunpack.c.l.s4 1966171168
    %v311 = vunpack.c.0.s8 %v310
    %v312 = vlaneseq
    %v313 = vshrl.u32 %v312, 7
    %v314 = vsub.s32 %v311, %v313
    %v315 = vrot.slane %v163, %v314
    %v317 = vunpack.c.l.s4 1966171168
    %v318 = vunpack.c.0.s8 %v317
    %v319 = vlaneseq
    %v320 = vshrl.u32 %v319, 7
    %v321 = vsub.s32 %v318, %v320
    %v322 = vrot.slane %v308, %v321
    %v323 = vcombine.high %v315, %v315
    %v324 = vcombine.high %v322, %v322
    %v326 = vunpack.c.l.s4 1966171168
    %v327 = vunpack.c.0.s8 %v326
    %v328 = vlaneseq
    %v329 = vshrl.u32 %v328, 7
    %v330 = vsub.s32 %v327, %v329
    %v331 = vrot.slane %v315, %v330
    %v333 = vunpack.c.l.s4 1966171168
    %v334 = vunpack.c.0.s8 %v333
    %v335 = vlaneseq
    %v336 = vshrl.u32 %v335, 7
    %v337 = vsub.s32 %v334, %v336
    %v338 = vrot.slane %v322, %v337
    %v340 = vunpack.c.l.s4 1966171168
    %v341 = vunpack.c.0.s8 %v340
    %v342 = vlaneseq
    %v343 = vshrl.u32 %v342, 7
    %v344 = vsub.s32 %v341, %v343
    %v345 = vrot.slane %v323, %v344
    %v347 = vunpack.c.l.s4 1966171168
    %v348 = vunpack.c.0.s8 %v347
    %v349 = vlaneseq
    %v350 = vshrl.u32 %v349, 7
    %v351 = vsub.s32 %v348, %v350
    %v352 = vrot.slane %v324, %v351
    %v353 = vcombine.high %v331, %v331
    %v354 = vcombine.high %v338, %v338
    %v355 = vcombine.high %v345, %v345
    %v356 = vcombine.high %v352, %v352
    %v357 = vlaneseq
    %v358 = vshrl.u32 %v357, 7
    %v359 = vsub.s32 0, %v358
    %v360 = vrot.slane %v331, %v359
    %v361 = vlaneseq
    %v362 = vshrl.u32 %v361, 7
    %v363 = vsub.s32 0, %v362
    %v364 = vrot.slane %v345, %v363
    %v365 = vlaneseq
    %v366 = vshrl.u32 %v365, 7
    %v367 = vsub.s32 0, %v366
    %v368 = vrot.slane %v353, %v367
    %v369 = vlaneseq
    %v370 = vshrl.u32 %v369, 7
    %v371 = vsub.s32 0, %v370
    %v372 = vrot.slane %v355, %v371
    %v373 = vlaneseq
    %v374 = vshrl.u32 %v373, 7
    %v375 = vsub.s32 0, %v374
    %v376 = vrot.slane %v338, %v375
    %v377 = vlaneseq
    %v378 = vshrl.u32 %v377, 7
    %v379 = vsub.s32 0, %v378
    %v380 = vrot.slane %v352, %v379
    %v381 = vlaneseq
    %v382 = vshrl.u32 %v381, 7
    %v383 = vsub.s32 0, %v382
    %v384 = vrot.slane %v354, %v383
    %v385 = vlaneseq
    %v386 = vshrl.u32 %v385, 7
    %v387 = vsub.s32 0, %v386
    %v388 = vrot.slane %v356, %v387
    %v397 = vadd.f32 %v269, %v360
    %v398 = vadd.f32 %v274, %v364
    %v399 = vadd.f32 %v279, %v368
    %v400 = vadd.f32 %v284, %v372
    %v401 = vadd.f32 %v289, %v376
    %v402 = vadd.f32 %v294, %v380
    %v403 = vadd.f32 %v299, %v384
    %v404 = vadd.f32 %v304, %v388
    %v405 = vtanh.pop %v397
    %v406 = vtanh.pop %v398
    %v407 = vtanh.pop %v399
    %v408 = vtanh.pop %v400
    %v409 = vtanh.pop %v401
    %v410 = vtanh.pop %v402
    %v411 = vtanh.pop %v403
    %v412 = vtanh.pop %v404
    %v413 = vld [vmem:[%s5] sm:$0x1]
    %v415 = vlaneseq
    %v416 = vshrl.u32 %v415, 7
    %v417 = vsub.s32 0, %v416
    %v418 = vrot.slane %v413, %v417
    %v420 = vmul.f32 %v405, %v418
    %v421 = vmul.f32 %v406, %v418
    %v422 = vmul.f32 %v407, %v418
    %v423 = vmul.f32 %v408, %v418
    %v424 = vmul.f32 %v409, %v418
    %v425 = vmul.f32 %v410, %v418
    %v426 = vmul.f32 %v411, %v418
    %v427 = vmul.f32 %v412, %v418
    %v428 = vsel %vm92, %v420, 0.0
    %429 = vadd.xlane.f32.xlu0 %v428
    %v430 = vpop.xlane.xlu0 %429
    %v431 = vsel %vm92, %v421, 0.0
    %432 = vadd.xlane.f32.xlu0 %v431
    %v433 = vpop.xlane.xlu0 %432
    %v434 = vsel %vm92, %v422, 0.0
    %435 = vadd.xlane.f32.xlu0 %v434
    %v436 = vpop.xlane.xlu0 %435
    %v437 = vsel %vm92, %v423, 0.0
    %438 = vadd.xlane.f32.xlu0 %v437
    %v439 = vpop.xlane.xlu0 %438
    %v440 = vsel %vm92, %v424, 0.0
    %441 = vadd.xlane.f32.xlu0 %v440
    %v442 = vpop.xlane.xlu0 %441
    %v443 = vsel %vm92, %v425, 0.0
    %444 = vadd.xlane.f32.xlu0 %v443
    %v445 = vpop.xlane.xlu0 %444
    %v446 = vsel %vm92, %v426, 0.0
    %447 = vadd.xlane.f32.xlu0 %v446
    %v448 = vpop.xlane.xlu0 %447
    %v449 = vsel %vm92, %v427, 0.0
    %450 = vadd.xlane.f32.xlu0 %v449
    %v451 = vpop.xlane.xlu0 %450
    %v452 = vld [vmem:[%s6] sm:$0xff]
    %vm453 = vcmp.eq.f32.partialorder %v452, 0.0
    %v462 = vlaneseq
    %v463 = vand.u32 %v462, 127
    %v464 = vlaneseq
    %v465 = vshrl.u32 %v464, 7
    %v466 = vsub.s32 %v463, %v465
    %v467 = vrot.slane %v430, %v466
    %v468 = vlaneseq
    %v469 = vshrl.u32 %v468, 7
    %v470 = vsub.s32 %v463, %v469
    %v471 = vrot.slane %v433, %v470
    %v472 = vlaneseq
    %v473 = vshrl.u32 %v472, 7
    %v474 = vsub.s32 %v463, %v473
    %v475 = vrot.slane %v436, %v474
    %v476 = vlaneseq
    %v477 = vshrl.u32 %v476, 7
    %v478 = vsub.s32 %v463, %v477
    %v479 = vrot.slane %v439, %v478
    %v480 = vlaneseq
    %v481 = vshrl.u32 %v480, 7
    %v482 = vsub.s32 %v463, %v481
    %v483 = vrot.slane %v442, %v482
    %v484 = vlaneseq
    %v485 = vshrl.u32 %v484, 7
    %v486 = vsub.s32 %v463, %v485
    %v487 = vrot.slane %v445, %v486
    %v488 = vlaneseq
    %v489 = vshrl.u32 %v488, 7
    %v490 = vsub.s32 %v463, %v489
    %v491 = vrot.slane %v448, %v490
    %v492 = vlaneseq
    %v493 = vshrl.u32 %v492, 7
    %v494 = vsub.s32 %v463, %v493
    %v495 = vrot.slane %v451, %v494
    %vm496 = vcmask 1041409
    %v497 = vsel %vm496, %v471, %v467
    %vm498 = vcmask 1042434
    %v499 = vsel %vm498, %v475, %v497
    %vm500 = vcmask 1043459
    %v501 = vsel %vm500, %v479, %v499
    %vm502 = vcmask 1044484
    %v503 = vsel %vm502, %v483, %v501
    %vm504 = vcmask 1045509
    %v505 = vsel %vm504, %v487, %v503
    %vm506 = vcmask 1046534
    %v507 = vsel %vm506, %v491, %v505
    %vm508 = vcmask 1047559
    %v509 = vsel %vm508, %v495, %v507
    %v511 = vsel %vm453, %v509, %v452
    %vm512 = vcmask 64512
    %v513 = vsel %vm512, %v511, -inf
    %514 = vmax.xlane.f32.xlu0 %v513
    %v515 = vpop.xlane.xlu0 %514
    %v516 = vsub.f32 %v511, %v515
    %v517 = vmul.f32 %v516, 1.442695
    %v518 = vpow.pop %v517
    %v519 = vsel %vm512, %v518, 0.0
    %520 = vadd.xlane.f32.xlu0 %v519
    %v521 = vpop.xlane.xlu0 %520
    %v522 = vrcp.pop %v521
    %v523 = vmul.f32 %v518, %v522
    %524 = vst.msk [vmem:[#allocation10] sm:$0xff] %vm512, %v523
    // Predicated region
    $region46: #{tpu_custom_call.1} parent=1 // pred_check
      _
    $region47: #{tpu_custom_call.1} parent=1 // pred_check_branch
      %526 = sbr.rel (0) target = $region49
    $region48: #{tpu_custom_call.1} parent=1 // pred_region
      %s528 = ssub.s32 128, 128
      %529 = vsyncadd [#allocation4], %s528
      %s531 = sshll.u32 [#allocation10], 4
      %s532 = int_to_ptr.vmem [resolvable:$true] %s531
      %534 = dma.vmem_to_hbm [thread:$0]  %s532, 128, %s7, [#allocation4]
    $region49: #{tpu_custom_call.1} parent=1 // pred_fallthru
      _
    // Predicated region
    $region50: #{tpu_custom_call.1} parent=1 // pred_check
      _
    $region51: #{tpu_custom_call.1} parent=1 // pred_check_branch
      %536 = sbr.rel (0) target = $region53
    $region52: #{tpu_custom_call.1} parent=1 // pred_region
      %537 = dma.done [#allocation4], 128
    $region53: #{tpu_custom_call.1} parent=1 // pred_fallthru
      _
    %538 = vsyncpa [#allocation3], 1
    %539 = vsyncpa [#allocation6], 1
    %540 = vsyncpa [#allocation9], 1
    %541 = vsyncpa [#allocation4], 1

</llo_original>
